<compile_context>
chip_gen: v7x
topology: tpu7x:2x2x1
jax: 0.10.0
libtpu: 0.0.40
codegen_flags: <defaults>
</compile_context>

<pallas_src>
import functools
import numpy as np
import jax
import jax.numpy as jnp
from jax.experimental import pallas as pl
from jax.experimental.pallas import tpu as pltpu


def _round_up(x, m):
    return ((x + m - 1) // m) * m


def _device_vmem_budget():
    """Per-generation VMEM budget (bytes) for vmem_limit_bytes / tile selection."""
    kind = ""
    try:
        kind = jax.devices()[0].device_kind.lower()
    except Exception:
        pass
    if "v4" in kind or "v5" in kind or "v6" in kind:
        return 100 * 1024 * 1024          # 128 MiB physical VMEM parts
    return 48 * 1024 * 1024               # v7x (64 MiB physical) / unknown: conservative


# ----------------------------------------------------------------------------
# Positional encoding table (pure JAX glue; mirrors get_pos_encoding)
# ----------------------------------------------------------------------------
def get_pos_encoding(embed_size, seq_len):
    assert embed_size % 2 == 0
    num_embeddings = 2 * seq_len + 1
    half_dim = embed_size // 2
    emb = np.log(10000) / (half_dim - 1)
    emb = jnp.exp(jnp.arange(half_dim, dtype=jnp.float32) * -emb)
    emb = (jnp.arange(-seq_len, seq_len + 1, dtype=jnp.float32)[:, None]
           * emb[None, :])
    emb = jnp.concatenate([jnp.sin(emb), jnp.cos(emb)], axis=1)
    return emb.reshape(num_embeddings, -1)


# ----------------------------------------------------------------------------
# Kernel 1: rel_fusion MLP applied to every (i, j) pair (row-tiled).
# ----------------------------------------------------------------------------
def rel_fusion_kernel(a_ref, b_ref, c_ref, d_ref,
                      w1a_ref, w1b_ref, w1c_ref, w1d_ref, b1_ref,
                      w2_ref, b2_ref, o_ref):
    f32 = jnp.float32
    h = jnp.dot(a_ref[...], w1a_ref[...], preferred_element_type=f32)
    h = h + jnp.dot(b_ref[...], w1b_ref[...], preferred_element_type=f32)
    h = h + jnp.dot(c_ref[...], w1c_ref[...], preferred_element_type=f32)
    h = h + jnp.dot(d_ref[...], w1d_ref[...], preferred_element_type=f32)
    h = h + b1_ref[...]
    h = jnp.maximum(h, 0.0)
    out = (jnp.dot(h.astype(jnp.bfloat16), w2_ref[...], preferred_element_type=f32)
           + b2_ref[...])
    o_ref[...] = out.astype(o_ref.dtype)


def rel_fusion_pallas(pe_ss, pe_se, pe_es, pe_ee, w1, b1, w2, b2, hidden, vmem_limit):
    n = pe_ss.shape[0]
    h4 = 4 * hidden

    # bigger row tiles on 128 MiB parts; the (tile, 4H) f32 intermediate is the limiter.
    max_tile = 1024 if vmem_limit >= 96 * 1024 * 1024 else 512
    tile = min(max_tile, _round_up(n, 8))
    tile = max(8, (tile // 8) * 8)
    n_pad = _round_up(n, tile)
    if n_pad != n:
        pad = ((0, n_pad - n), (0, 0))
        pe_ss = jnp.pad(pe_ss, pad)
        pe_se = jnp.pad(pe_se, pad)
        pe_es = jnp.pad(pe_es, pad)
        pe_ee = jnp.pad(pe_ee, pad)

    w1b16 = w1.astype(jnp.bfloat16)
    w1a = w1b16[0 * hidden:1 * hidden]
    w1bb = w1b16[1 * hidden:2 * hidden]
    w1c = w1b16[2 * hidden:3 * hidden]
    w1d = w1b16[3 * hidden:4 * hidden]
    w2b = w2.astype(jnp.bfloat16)

    def row_spec():
        return pl.BlockSpec((tile, hidden), lambda i: (i, 0))

    def rep(shape):
        nd = len(shape)
        return pl.BlockSpec(shape, lambda i, _nd=nd: (0,) * _nd)

    out = pl.pallas_call(
        rel_fusion_kernel,
        out_shape=jax.ShapeDtypeStruct((n_pad, hidden), jnp.bfloat16),
        grid_spec=pltpu.PrefetchScalarGridSpec(
            num_scalar_prefetch=0,
            grid=(n_pad // tile,),
            in_specs=[row_spec(), row_spec(), row_spec(), row_spec(),
                      rep((hidden, h4)), rep((hidden, h4)),
                      rep((hidden, h4)), rep((hidden, h4)),
                      rep((1, h4)), rep((h4, hidden)), rep((1, hidden))],
            out_specs=pl.BlockSpec((tile, hidden), lambda i: (i, 0)),
        ),
        compiler_params=pltpu.CompilerParams(
            dimension_semantics=("parallel",),
            vmem_limit_bytes=vmem_limit),
    )(pe_ss, pe_se, pe_es, pe_ee, w1a, w1bb, w1c, w1d, b1, w2b, b2)
    return out[:n]


# ----------------------------------------------------------------------------
# Kernel 2: per-layer projection prep (q+u, k, v, wr-folded wqv, br-dot bias).
# Hoists every projection out of the kv streaming loop.
# ----------------------------------------------------------------------------
def qkv_prep_kernel(x_ref, wq_ref, bq_ref, wk_ref, bk_ref, wv_ref, bv_ref,
                    wr_ref, br_ref, u_ref, vp_ref,
                    qu_out, k_out, v_out, wqv_out, bdb_out,
                    *, num_heads, per_size, hidden):
    f32 = jnp.float32
    bf16 = jnp.bfloat16
    x = x_ref[0].astype(bf16)                                  # (TR, H)
    tr = x.shape[0]

    q = jnp.dot(x, wq_ref[...], preferred_element_type=f32) + bq_ref[...]
    k = jnp.dot(x, wk_ref[...], preferred_element_type=f32) + bk_ref[...]
    v = jnp.dot(x, wv_ref[...], preferred_element_type=f32) + bv_ref[...]

    qu_out[0] = (q + u_ref[...]).astype(bf16)
    k_out[0] = k.astype(bf16)
    v_out[0] = v.astype(bf16)

    # Fold wr through (q + v_param):
    #   wqv[r, h, c] = sum_p (q+v)[r, h*P+p] * wr[c, h*P+p]
    qv = q + vp_ref[...]                                        # (TR, H) f32
    qv_h = jnp.swapaxes(qv.reshape(tr, num_heads, per_size), 0, 1).astype(bf16)   # (NH,TR,P)
    wr_h = jnp.swapaxes(wr_ref[...].reshape(hidden, num_heads, per_size), 0, 1)   # (NH,H,P)
    wqv = jnp.einsum('hrp,hcp->hrc', qv_h, wr_h,
                     preferred_element_type=f32)                # (NH, TR, H)
    wqv_out[0] = jnp.swapaxes(wqv, 0, 1).astype(bf16)           # (TR, NH, H)

    # constant-over-keys br contribution of the B+D term
    bdb_out[0] = (qv * br_ref[...]).reshape(tr, num_heads, per_size).sum(axis=-1)  # (TR,NH)


def qkv_prep_pallas(x, p, *, num_heads, per_size, tr, vmem_limit):
    B, s_pad, H = x.shape
    bf16 = jnp.bfloat16
    kernel = functools.partial(qkv_prep_kernel, num_heads=num_heads,
                               per_size=per_size, hidden=H)

    def rep(shape):
        nd = len(shape)
        return pl.BlockSpec(shape, lambda b, ri, _nd=nd: (0,) * _nd)

    def row():
        return pl.BlockSpec((1, tr, H), lambda b, ri: (b, ri, 0))

    out_shapes = (
        jax.ShapeDtypeStruct((B, s_pad, H), bf16),                   # q + u
        jax.ShapeDtypeStruct((B, s_pad, H), bf16),                   # k
        jax.ShapeDtypeStruct((B, s_pad, H), bf16),                   # v
        jax.ShapeDtypeStruct((B, s_pad, num_heads, H), bf16),        # wqv (wr folded)
        jax.ShapeDtypeStruct((B, s_pad, num_heads), jnp.float32),    # br-dot bias
    )
    out_specs = (
        pl.BlockSpec((1, tr, H), lambda b, ri: (b, ri, 0)),
        pl.BlockSpec((1, tr, H), lambda b, ri: (b, ri, 0)),
        pl.BlockSpec((1, tr, H), lambda b, ri: (b, ri, 0)),
        pl.BlockSpec((1, tr, num_heads, H), lambda b, ri: (b, ri, 0, 0)),
        pl.BlockSpec((1, tr, num_heads), lambda b, ri: (b, ri, 0)),
    )

    return pl.pallas_call(
        kernel,
        out_shape=out_shapes,
        grid_spec=pltpu.PrefetchScalarGridSpec(
            num_scalar_prefetch=0,
            grid=(B, s_pad // tr),
            in_specs=[row(),
                      rep((H, H)), rep((1, H)),
                      rep((H, H)), rep((1, H)),
                      rep((H, H)), rep((1, H)),
                      rep((H, H)), rep((1, H)),
                      rep((1, H)), rep((1, H))],
            out_specs=out_specs,
        ),
        compiler_params=pltpu.CompilerParams(
            dimension_semantics=("parallel", "parallel"),
            vmem_limit_bytes=vmem_limit),
    )(x,
      p['wq'].astype(bf16), p['bq'],
      p['wk'].astype(bf16), p['bk'],
      p['wv'].astype(bf16), p['bv'],
      p['wr'].astype(bf16), p['br'],
      p['u'].reshape(1, H), p['v'].reshape(1, H))


# ----------------------------------------------------------------------------
# Kernel 3: attention core.  Grid = (batch, q-block, kv-block) with an online
# softmax over the kv axis; rel streamed as (TQ, TKV, H) bf16 tiles.  No weight
# matrices are held in VMEM here.
# ----------------------------------------------------------------------------
def attention_kernel(qu_ref, k_ref, v_ref, wqv_ref, bdb_ref, rel_ref, mask_ref,
                     o_ref, m_scr, l_scr, acc_scr,
                     *, num_heads, per_size, hidden):
    f32 = jnp.float32
    bf16 = jnp.bfloat16
    ki = pl.program_id(2)
    nk = pl.num_programs(2)

    @pl.when(ki == 0)
    def _init():
        m_scr[...] = jnp.full_like(m_scr, -1e30)
        l_scr[...] = jnp.zeros_like(l_scr)
        acc_scr[...] = jnp.zeros_like(acc_scr)

    tq = qu_ref.shape[1]
    tkv = k_ref.shape[1]

    qu = qu_ref[0]                         # (TQ, H)  bf16  (q + u already added)
    kk = k_ref[0]                          # (TKV, H) bf16
    vv = v_ref[0]                          # (TKV, H) bf16
    mask = mask_ref[...]                   # (1, 1, TKV) int32: 1 = valid key

    qu_h = jnp.swapaxes(qu.reshape(tq, num_heads, per_size), 0, 1)    # (NH,TQ,P)
    k_h = jnp.swapaxes(kk.reshape(tkv, num_heads, per_size), 0, 1)    # (NH,TKV,P)
    v_h = jnp.swapaxes(vv.reshape(tkv, num_heads, per_size), 0, 1)    # (NH,TKV,P)

    # A + C : (q + u) @ k^T, batched over heads
    ac = jnp.einsum('hqp,hkp->hqk', qu_h, k_h,
                    preferred_element_type=f32)                        # (NH,TQ,TKV)

    # B + D : rel tile contracted with the wr-folded (q + v) tensor (batched over q)
    wqv_t = wqv_ref[0]                                                 # (TQ, NH, H) bf16
    rel_t = rel_ref[0]                                                 # (TQ, TKV, H) bf16
    bd = jnp.einsum('qhc,qkc->qhk', wqv_t, rel_t,
                    preferred_element_type=f32)                        # (TQ, NH, TKV)
    bd = bd + bdb_ref[0][:, :, None]                                   # + br constant
    bd = jnp.swapaxes(bd, 0, 1)                                        # (NH, TQ, TKV)

    scale = 1.0 / float(np.sqrt(per_size))
    score = (ac + bd) * scale
    score = jnp.where(mask > 0, score, -1e15)

    # online softmax update
    m_prev = m_scr[...]                                                # (NH, TQ, 1)
    m_cur = jnp.max(score, axis=-1, keepdims=True)
    m_new = jnp.maximum(m_prev, m_cur)
    alpha = jnp.exp(m_prev - m_new)
    p_att = jnp.exp(score - m_new)                                     # (NH, TQ, TKV)
    l_scr[...] = alpha * l_scr[...] + jnp.sum(p_att, axis=-1, keepdims=True)
    pv = jnp.einsum('hqk,hkp->hqp', p_att.astype(bf16), v_h,
                    preferred_element_type=f32)                        # (NH, TQ, P)
    acc_scr[...] = alpha * acc_scr[...] + pv
    m_scr[...] = m_new

    @pl.when(ki == nk - 1)
    def _finalize():
        out_h = acc_scr[...] / l_scr[...]                              # (NH, TQ, P)
        mh = jnp.swapaxes(out_h, 0, 1).reshape(tq, hidden)             # (TQ, H) lane-dense
        o_ref[0] = mh.astype(o_ref.dtype)


def attention_pallas(q_u, k, v, wqv, bdb, rel_pos, mask,
                     *, num_heads, per_size, tq, tkv, vmem_limit):
    B, s_pad, H = q_u.shape
    kernel = functools.partial(attention_kernel, num_heads=num_heads,
                               per_size=per_size, hidden=H)

    in_specs = [
        pl.BlockSpec((1, tq, H), lambda b, qi, ki: (b, qi, 0)),             # q + u
        pl.BlockSpec((1, tkv, H), lambda b, qi, ki: (b, ki, 0)),            # k
        pl.BlockSpec((1, tkv, H), lambda b, qi, ki: (b, ki, 0)),            # v
        pl.BlockSpec((1, tq, num_heads, H), lambda b, qi, ki: (b, qi, 0, 0)),  # wqv
        pl.BlockSpec((1, tq, num_heads), lambda b, qi, ki: (b, qi, 0)),     # br bias
        pl.BlockSpec((1, tq, tkv, H), lambda b, qi, ki: (b, qi, ki, 0)),    # rel tile
        pl.BlockSpec((1, 1, tkv), lambda b, qi, ki: (b, 0, ki)),            # key mask
    ]

    return pl.pallas_call(
        kernel,
        out_shape=jax.ShapeDtypeStruct((B, s_pad, H), jnp.bfloat16),
        grid_spec=pltpu.PrefetchScalarGridSpec(
            num_scalar_prefetch=0,
            grid=(B, s_pad // tq, s_pad // tkv),
            in_specs=in_specs,
            out_specs=pl.BlockSpec((1, tq, H), lambda b, qi, ki: (b, qi, 0)),
            scratch_shapes=[
                pltpu.VMEM((num_heads, tq, 1), jnp.float32),           # m
                pltpu.VMEM((num_heads, tq, 1), jnp.float32),           # l
                pltpu.VMEM((num_heads, tq, per_size), jnp.float32),    # acc
            ],
        ),
        compiler_params=pltpu.CompilerParams(
            dimension_semantics=("parallel", "parallel", "arbitrary"),
            vmem_limit_bytes=vmem_limit),
    )(q_u, k, v, wqv, bdb, rel_pos, mask)


# ----------------------------------------------------------------------------
# Kernel 4: tail = final attention projection + residual + LN1 + FFN + residual + LN2.
# Keeps the FFN weights out of the kv streaming kernel.
# ----------------------------------------------------------------------------
def attn_ffn_tail_kernel(x_ref, a_ref, wf_ref, bf_ref, ln1g_ref, ln1b_ref,
                         w1_ref, b1_ref, w2_ref, b2_ref, ln2g_ref, ln2b_ref,
                         o_ref):
    f32 = jnp.float32
    bf16 = jnp.bfloat16
    x = x_ref[0]                                               # (TR, H) f32 (layer input)

    attn = (jnp.dot(a_ref[0], wf_ref[...], preferred_element_type=f32)
            + bf_ref[...])                                     # final linear

    # residual + LayerNorm 1 (f32)
    y = x + attn
    mu = jnp.mean(y, axis=-1, keepdims=True)
    var = jnp.mean((y - mu) ** 2, axis=-1, keepdims=True)
    y = (y - mu) * jax.lax.rsqrt(var + 1e-5) * ln1g_ref[...] + ln1b_ref[...]

    # FFN
    f = jnp.dot(y.astype(bf16), w1_ref[...], preferred_element_type=f32) + b1_ref[...]
    f = jnp.maximum(f, 0.0)
    f = jnp.dot(f.astype(bf16), w2_ref[...], preferred_element_type=f32) + b2_ref[...]

    # residual + LayerNorm 2 (f32)
    z = y + f
    mu2 = jnp.mean(z, axis=-1, keepdims=True)
    var2 = jnp.mean((z - mu2) ** 2, axis=-1, keepdims=True)
    z = (z - mu2) * jax.lax.rsqrt(var2 + 1e-5) * ln2g_ref[...] + ln2b_ref[...]
    o_ref[0] = z.astype(o_ref.dtype)


def attn_ffn_tail_pallas(x, attn_heads, p, *, tr, vmem_limit):
    B, s_pad, H = x.shape
    FF = p['w1'].shape[1]
    bf16 = jnp.bfloat16

    def rep(shape):
        nd = len(shape)
        return pl.BlockSpec(shape, lambda b, ri, _nd=nd: (0,) * _nd)

    return pl.pallas_call(
        attn_ffn_tail_kernel,
        out_shape=jax.ShapeDtypeStruct((B, s_pad, H), jnp.float32),
        grid_spec=pltpu.PrefetchScalarGridSpec(
            num_scalar_prefetch=0,
            grid=(B, s_pad // tr),
            in_specs=[pl.BlockSpec((1, tr, H), lambda b, ri: (b, ri, 0)),   # layer input
                      pl.BlockSpec((1, tr, H), lambda b, ri: (b, ri, 0)),   # head outputs
                      rep((H, H)), rep((1, H)),      # wf, bf
                      rep((1, H)), rep((1, H)),      # ln1 gamma, beta
                      rep((H, FF)), rep((1, FF)),    # w1, b1
                      rep((FF, H)), rep((1, H)),     # w2, b2
                      rep((1, H)), rep((1, H))],     # ln2 gamma, beta
            out_specs=pl.BlockSpec((1, tr, H), lambda b, ri: (b, ri, 0)),
        ),
        compiler_params=pltpu.CompilerParams(
            dimension_semantics=("parallel", "parallel"),
            vmem_limit_bytes=vmem_limit),
    )(x, attn_heads,
      p['wf'].astype(bf16), p['bf'],
      p['ln1g'], p['ln1b'],
      p['w1'].astype(bf16), p['b1'],
      p['w2'].astype(bf16), p['b2'],
      p['ln2g'], p['ln2b'])


# ----------------------------------------------------------------------------
# Tile selection for the attention kernel (per-generation VMEM budget aware)
# ----------------------------------------------------------------------------
def _select_attn_tiles(s_pad, H, nh, budget):
    per = H // nh

    def est(tq, tkv):
        return (2 * tq * tkv * H * 2          # rel tile, double-buffered, bf16
                + 2 * 2 * tkv * H * 2         # k + v tiles
                + 2 * tq * H * 2              # q + u
                + 2 * nh * tq * H * 2         # wqv
                + 2 * tq * nh * 4             # bias
                + 2 * tq * H * 4              # output tile
                + nh * tq * (per + 2) * 4     # scratch
                + 2 * tkv * 8)                # mask

    # tkv restricted to multiples of 128 (mask last-dim tiling constraint)
    candidates = [(128, 256), (128, 128), (64, 256), (64, 128), (32, 128)]
    divisible = [(a, b) for a, b in candidates if s_pad % a == 0 and s_pad % b == 0]
    for tq, tkv in divisible:
        if est(tq, tkv) <= 0.7 * budget:
            return tq, tkv
    return divisible[-1] if divisible else (64, 128)


# ----------------------------------------------------------------------------
# Parameter init (deterministic, PyTorch-like uniform fan_in init)
# ----------------------------------------------------------------------------
def init_params(key, hidden, ff, num_layers, num_heads):
    per = hidden // num_heads

    def lin(k, fan_in, fan_out):
        k1, k2 = jax.random.split(k)
        bound = 1.0 / np.sqrt(fan_in)
        w = jax.random.uniform(k1, (fan_in, fan_out), jnp.float32, -bound, bound)
        b = jax.random.uniform(k2, (1, fan_out), jnp.float32, -bound, bound)
        return w, b

    params = {}
    key, kf1, kf2 = jax.random.split(key, 3)
    params['fusion_w1'], params['fusion_b1'] = lin(kf1, 4 * hidden, 4 * hidden)
    params['fusion_w2'], params['fusion_b2'] = lin(kf2, 4 * hidden, hidden)

    layers = []
    for _ in range(num_layers):
        key, *ks = jax.random.split(key, 10)
        p = {}
        p['wq'], p['bq'] = lin(ks[0], hidden, hidden)
        p['wk'], p['bk'] = lin(ks[1], hidden, hidden)
        p['wv'], p['bv'] = lin(ks[2], hidden, hidden)
        p['wr'], p['br'] = lin(ks[3], hidden, hidden)
        p['wf'], p['bf'] = lin(ks[4], hidden, hidden)
        p['u'] = jax.random.uniform(ks[5], (num_heads, per))
        p['v'] = jax.random.uniform(ks[6], (num_heads, per))
        p['w1'], p['b1'] = lin(ks[7], hidden, ff)
        p['w2'], p['b2'] = lin(ks[8], ff, hidden)
        p['ln1g'] = jnp.ones((1, hidden), jnp.float32)
        p['ln1b'] = jnp.zeros((1, hidden), jnp.float32)
        p['ln2g'] = jnp.ones((1, hidden), jnp.float32)
        p['ln2b'] = jnp.zeros((1, hidden), jnp.float32)
        layers.append(p)
    params['layers'] = layers
    return params


# ----------------------------------------------------------------------------
# Full forward pass (Transformer_Encoder.forward)
# ----------------------------------------------------------------------------
def transformer_encoder_forward(inp, pos_s, pos_e, sen_len, lat_len, params,
                                *, max_len_param, num_heads):
    B, S, H = inp.shape
    vmem_limit = _device_vmem_budget()

    s8 = _round_up(S, 8)
    if s8 <= 128:
        s_pad = s8
        tq = tkv = s_pad
    else:
        s_pad = _round_up(S, 128)
        tq, tkv = _select_attn_tiles(s_pad, H, num_heads, vmem_limit)
    tr = s_pad if s_pad <= 128 else 128          # row tile for prep / tail kernels

    if s_pad != S:
        pad = s_pad - S
        inp = jnp.pad(inp, ((0, 0), (0, pad), (0, 0)))
        pos_s = jnp.pad(pos_s, ((0, 0), (0, pad)))
        pos_e = jnp.pad(pos_e, ((0, 0), (0, pad)))

    # positional encoding table, pos_norm=True (mirrors the reference)
    pe = get_pos_encoding(H, max_len_param)
    pe = pe / jnp.sum(pe, axis=-1, keepdims=True)

    # relative-position indices.
    # TODO(synk): the torch.unique dedup in get_rel_fusion is a compute optimization only;
    # applying the fusion MLP to every (i, j) pair is numerically identical.
    ss = pos_s[:, :, None] - pos_s[:, None, :] + max_len_param
    se = pos_s[:, :, None] - pos_e[:, None, :] + max_len_param
    es = pos_e[:, :, None] - pos_s[:, None, :] + max_len_param
    ee = pos_e[:, :, None] - pos_e[:, None, :] + max_len_param

    # TODO(synk): the pe gather stays in XLA (in-kernel dynamic gather on TPU has layout
    # constraints); rel itself is still only streamed per tile inside the attention kernel.
    def gather_flat(idx):
        return pe[idx].reshape(-1, H).astype(jnp.bfloat16)

    rel_flat = rel_fusion_pallas(gather_flat(ss), gather_flat(se),
                                 gather_flat(es), gather_flat(ee),
                                 params['fusion_w1'], params['fusion_b1'],
                                 params['fusion_w2'], params['fusion_b2'],
                                 H, vmem_limit)
    rel_pos = rel_flat.reshape(B, s_pad, s_pad, H)               # bf16

    # generate_mask(sen_len + lat_len, max_len): valid key positions per batch
    lengths = sen_len + lat_len
    mask = (jnp.arange(s_pad)[None, :] < lengths[:, None]).astype(jnp.int32)
    mask = mask[:, None, :]                                      # (B, 1, S_pad)

    per = H // num_heads
    x = inp
    for p_layer in params['layers']:
        q_u, k, v, wqv, bdb = qkv_prep_pallas(
            x, p_layer, num_heads=num_heads, per_size=per, tr=tr,
            vmem_limit=vmem_limit)
        heads = attention_pallas(
            q_u, k, v, wqv, bdb, rel_pos, mask,
            num_heads=num_heads, per_size=per, tq=tq, tkv=tkv,
            vmem_limit=vmem_limit)
        x = attn_ffn_tail_pallas(x, heads, p_layer, tr=tr, vmem_limit=vmem_limit)
    return x[:, :S, :]


if __name__ == "__main__":
    B, S, H, FF, NH, NL = 2, 8, 32, 64, 4, 2
    MAX_LEN = 8

    key = jax.random.PRNGKey(0)
    kp, kx = jax.random.split(key)
    params = init_params(kp, H, FF, NL, NH)

    inp = jax.random.normal(kx, (B, S, H), jnp.float32)
    pos_s = jnp.tile(jnp.arange(S, dtype=jnp.int32)[None, :], (B, 1))
    pos_e = jnp.minimum(pos_s + 1, MAX_LEN)
    sen_len = jnp.array([6, 8], dtype=jnp.int32)
    lat_len = jnp.array([1, 0], dtype=jnp.int32)

    out = transformer_encoder_forward(inp, pos_s, pos_e, sen_len, lat_len, params,
                                      max_len_param=MAX_LEN, num_heads=NH)
    out = jax.block_until_ready(out)
    assert out.shape == (B, S, H)
    assert bool(jnp.all(jnp.isfinite(out)))
    print("KERNEL_OK")
</pallas_src>

<mosaic_0001>
module attributes {stable_mosaic.version = 11 : i64} {
  func.func @rel_fusion_kernel(%arg0: i32, %arg1: memref<128x32xbf16, #tpu.memory_space<vmem>>, %arg2: memref<128x32xbf16, #tpu.memory_space<vmem>>, %arg3: memref<128x32xbf16, #tpu.memory_space<vmem>>, %arg4: memref<128x32xbf16, #tpu.memory_space<vmem>>, %arg5: memref<32x128xbf16, #tpu.memory_space<vmem>>, %arg6: memref<32x128xbf16, #tpu.memory_space<vmem>>, %arg7: memref<32x128xbf16, #tpu.memory_space<vmem>>, %arg8: memref<32x128xbf16, #tpu.memory_space<vmem>>, %arg9: memref<1x128xf32, #tpu.memory_space<vmem>>, %arg10: memref<128x32xbf16, #tpu.memory_space<vmem>>, %arg11: memref<1x32xf32, #tpu.memory_space<vmem>>, %arg12: memref<128x32xbf16, #tpu.memory_space<vmem>>) attributes {dimension_semantics = [#tpu.dimension_semantics<parallel>], iteration_bounds = array<i64: 1>, scalar_prefetch = 0 : i64, scratch_operands = 0 : i64, tpu.core_type = #tpu.core_type<tc>, window_params = [{transform_indices = @transform_0, window_bounds = array<i64: 128, 32>}, {transform_indices = @transform_1, window_bounds = array<i64: 128, 32>}, {transform_indices = @transform_2, window_bounds = array<i64: 128, 32>}, {transform_indices = @transform_3, window_bounds = array<i64: 128, 32>}, {pipeline_mode = #tpu.pipeline_mode<synchronous>, transform_indices = @transform_4, window_bounds = array<i64: 32, 128>}, {pipeline_mode = #tpu.pipeline_mode<synchronous>, transform_indices = @transform_5, window_bounds = array<i64: 32, 128>}, {pipeline_mode = #tpu.pipeline_mode<synchronous>, transform_indices = @transform_6, window_bounds = array<i64: 32, 128>}, {pipeline_mode = #tpu.pipeline_mode<synchronous>, transform_indices = @transform_7, window_bounds = array<i64: 32, 128>}, {pipeline_mode = #tpu.pipeline_mode<synchronous>, transform_indices = @transform_8, window_bounds = array<i64: 1, 128>}, {pipeline_mode = #tpu.pipeline_mode<synchronous>, transform_indices = @transform_9, window_bounds = array<i64: 128, 32>}, {pipeline_mode = #tpu.pipeline_mode<synchronous>, transform_indices = @transform_10, window_bounds = array<i64: 1, 32>}, {transform_indices = @transform_11, window_bounds = array<i64: 128, 32>}]} {
    %c0 = arith.constant 0 : index
    %c0_0 = arith.constant 0 : index
    %0 = vector.load %arg1[%c0, %c0_0] : memref<128x32xbf16, #tpu.memory_space<vmem>>, vector<128x32xbf16>
    %c0_1 = arith.constant 0 : index
    %c0_2 = arith.constant 0 : index
    %1 = vector.load %arg5[%c0_1, %c0_2] : memref<32x128xbf16, #tpu.memory_space<vmem>>, vector<32x128xbf16>
    %cst = arith.constant dense<0.000000e+00> : vector<128x128xf32>
    %2 = tpu.matmul %0, %1, %cst {dimension_numbers = #tpu.dot_dimension_numbers<[1], [0], [0], [1], [0, 0, 1, 1], [], []>} : vector<128x32xbf16>, vector<32x128xbf16>, vector<128x128xf32> -> vector<128x128xf32>
    %c0_3 = arith.constant 0 : index
    %c0_4 = arith.constant 0 : index
    %3 = vector.load %arg2[%c0_3, %c0_4] : memref<128x32xbf16, #tpu.memory_space<vmem>>, vector<128x32xbf16>
    %c0_5 = arith.constant 0 : index
    %c0_6 = arith.constant 0 : index
    %4 = vector.load %arg6[%c0_5, %c0_6] : memref<32x128xbf16, #tpu.memory_space<vmem>>, vector<32x128xbf16>
    %cst_7 = arith.constant dense<0.000000e+00> : vector<128x128xf32>
    %5 = tpu.matmul %3, %4, %cst_7 {dimension_numbers = #tpu.dot_dimension_numbers<[1], [0], [0], [1], [0, 0, 1, 1], [], []>} : vector<128x32xbf16>, vector<32x128xbf16>, vector<128x128xf32> -> vector<128x128xf32>
    %6 = arith.addf %2, %5 : vector<128x128xf32>
    %c0_8 = arith.constant 0 : index
    %c0_9 = arith.constant 0 : index
    %7 = vector.load %arg3[%c0_8, %c0_9] : memref<128x32xbf16, #tpu.memory_space<vmem>>, vector<128x32xbf16>
    %c0_10 = arith.constant 0 : index
    %c0_11 = arith.constant 0 : index
    %8 = vector.load %arg7[%c0_10, %c0_11] : memref<32x128xbf16, #tpu.memory_space<vmem>>, vector<32x128xbf16>
    %cst_12 = arith.constant dense<0.000000e+00> : vector<128x128xf32>
    %9 = tpu.matmul %7, %8, %cst_12 {dimension_numbers = #tpu.dot_dimension_numbers<[1], [0], [0], [1], [0, 0, 1, 1], [], []>} : vector<128x32xbf16>, vector<32x128xbf16>, vector<128x128xf32> -> vector<128x128xf32>
    %10 = arith.addf %6, %9 : vector<128x128xf32>
    %c0_13 = arith.constant 0 : index
    %c0_14 = arith.constant 0 : index
    %11 = vector.load %arg4[%c0_13, %c0_14] : memref<128x32xbf16, #tpu.memory_space<vmem>>, vector<128x32xbf16>
    %c0_15 = arith.constant 0 : index
    %c0_16 = arith.constant 0 : index
    %12 = vector.load %arg8[%c0_15, %c0_16] : memref<32x128xbf16, #tpu.memory_space<vmem>>, vector<32x128xbf16>
    %cst_17 = arith.constant dense<0.000000e+00> : vector<128x128xf32>
    %13 = tpu.matmul %11, %12, %cst_17 {dimension_numbers = #tpu.dot_dimension_numbers<[1], [0], [0], [1], [0, 0, 1, 1], [], []>} : vector<128x32xbf16>, vector<32x128xbf16>, vector<128x128xf32> -> vector<128x128xf32>
    %14 = arith.addf %10, %13 : vector<128x128xf32>
    %c0_18 = arith.constant 0 : index
    %c0_19 = arith.constant 0 : index
    %15 = vector.load %arg9[%c0_18, %c0_19] : memref<1x128xf32, #tpu.memory_space<vmem>>, vector<1x128xf32>
    %16 = vector.broadcast %15 : vector<1x128xf32> to vector<128x128xf32>
    %17 = arith.addf %14, %16 : vector<128x128xf32>
    %cst_20 = arith.constant 0.000000e+00 : f32
    %18 = vector.broadcast %cst_20 : f32 to vector<128x128xf32>
    %19 = arith.maximumf %17, %18 : vector<128x128xf32>
    %20 = arith.truncf %19 : vector<128x128xf32> to vector<128x128xbf16>
    %c0_21 = arith.constant 0 : index
    %c0_22 = arith.constant 0 : index
    %21 = vector.load %arg10[%c0_21, %c0_22] : memref<128x32xbf16, #tpu.memory_space<vmem>>, vector<128x32xbf16>
    %cst_23 = arith.constant dense<0.000000e+00> : vector<128x32xf32>
    %22 = tpu.matmul %20, %21, %cst_23 {dimension_numbers = #tpu.dot_dimension_numbers<[1], [0], [0], [1], [0, 0, 1, 1], [], []>} : vector<128x128xbf16>, vector<128x32xbf16>, vector<128x32xf32> -> vector<128x32xf32>
    %c0_24 = arith.constant 0 : index
    %c0_25 = arith.constant 0 : index
    %23 = vector.load %arg11[%c0_24, %c0_25] : memref<1x32xf32, #tpu.memory_space<vmem>>, vector<1x32xf32>
    %24 = vector.broadcast %23 : vector<1x32xf32> to vector<128x32xf32>
    %25 = arith.addf %22, %24 : vector<128x32xf32>
    %26 = arith.truncf %25 : vector<128x32xf32> to vector<128x32xbf16>
    %c0_26 = arith.constant 0 : index
    %c0_27 = arith.constant 0 : index
    %27 = vector.load %arg12[%c0_26, %c0_27] : memref<128x32xbf16, #tpu.memory_space<vmem>>, vector<128x32xbf16>
    tpu.vector_store %arg12[%c0_26, %c0_27], %26 {strides = array<i32>} : memref<128x32xbf16, #tpu.memory_space<vmem>>, vector<128x32xbf16>,
    return
  }
  func.func @transform_0(%arg0: i32) -> (i32, i32) {
    %c0_i32 = arith.constant 0 : i32
    %c0_i32_0 = arith.constant 0 : i32
    return %arg0, %c0_i32 : i32, i32
  }
  func.func @transform_1(%arg0: i32) -> (i32, i32) {
    %c0_i32 = arith.constant 0 : i32
    %c0_i32_0 = arith.constant 0 : i32
    return %arg0, %c0_i32 : i32, i32
  }
  func.func @transform_2(%arg0: i32) -> (i32, i32) {
    %c0_i32 = arith.constant 0 : i32
    %c0_i32_0 = arith.constant 0 : i32
    return %arg0, %c0_i32 : i32, i32
  }
  func.func @transform_3(%arg0: i32) -> (i32, i32) {
    %c0_i32 = arith.constant 0 : i32
    %c0_i32_0 = arith.constant 0 : i32
    return %arg0, %c0_i32 : i32, i32
  }
  func.func @transform_4(%arg0: i32) -> (i32, i32) {
    %c0_i32 = arith.constant 0 : i32
    %c0_i32_0 = arith.constant 0 : i32
    %c0_i32_1 = arith.constant 0 : i32
    return %c0_i32, %c0_i32_0 : i32, i32
  }
  func.func @transform_5(%arg0: i32) -> (i32, i32) {
    %c0_i32 = arith.constant 0 : i32
    %c0_i32_0 = arith.constant 0 : i32
    %c0_i32_1 = arith.constant 0 : i32
    return %c0_i32, %c0_i32_0 : i32, i32
  }
  func.func @transform_6(%arg0: i32) -> (i32, i32) {
    %c0_i32 = arith.constant 0 : i32
    %c0_i32_0 = arith.constant 0 : i32
    %c0_i32_1 = arith.constant 0 : i32
    return %c0_i32, %c0_i32_0 : i32, i32
  }
  func.func @transform_7(%arg0: i32) -> (i32, i32) {
    %c0_i32 = arith.constant 0 : i32
    %c0_i32_0 = arith.constant 0 : i32
    %c0_i32_1 = arith.constant 0 : i32
    return %c0_i32, %c0_i32_0 : i32, i32
  }
  func.func @transform_8(%arg0: i32) -> (i32, i32) {
    %c0_i32 = arith.constant 0 : i32
    %c0_i32_0 = arith.constant 0 : i32
    %c0_i32_1 = arith.constant 0 : i32
    return %c0_i32, %c0_i32_0 : i32, i32
  }
  func.func @transform_9(%arg0: i32) -> (i32, i32) {
    %c0_i32 = arith.constant 0 : i32
    %c0_i32_0 = arith.constant 0 : i32
    %c0_i32_1 = arith.constant 0 : i32
    return %c0_i32, %c0_i32_0 : i32, i32
  }
  func.func @transform_10(%arg0: i32) -> (i32, i32) {
    %c0_i32 = arith.constant 0 : i32
    %c0_i32_0 = arith.constant 0 : i32
    %c0_i32_1 = arith.constant 0 : i32
    return %c0_i32, %c0_i32_0 : i32, i32
  }
  func.func @transform_11(%arg0: i32) -> (i32, i32) {
    %c0_i32 = arith.constant 0 : i32
    %c0_i32_0 = arith.constant 0 : i32
    return %arg0, %c0_i32 : i32, i32
  }
}

</mosaic_0001>

<llo_original>
// kernel: tpu_custom_call.1
$region0: #{tpu_custom_call.1}
  #allocation0 [shape = 'u32[]', space=smem, size = 0x4, offset = 0x4, fixed_abs, tag = 'smem constant byte address 0x4 - core index']
  #allocation1 [shape = 'u32[144,128]{1,0:T(1,128)}', space=vmem, size = 0x12000, scoped, tag = 'internal scratch']
  %s0 = inlined_call_operand.vmem [shape: bf16[128,32], index: 0, kind: input, shape index: {}]
  %s1 = inlined_call_operand.vmem [shape: bf16[128,32], index: 1, kind: input, shape index: {}]
  %s2 = inlined_call_operand.vmem [shape: bf16[128,32], index: 2, kind: input, shape index: {}]
  %s3 = inlined_call_operand.vmem [shape: bf16[128,32], index: 3, kind: input, shape index: {}]
  %s4 = inlined_call_operand.vmem [shape: bf16[32,128], index: 4, kind: input, shape index: {}]
  %s5 = inlined_call_operand.vmem [shape: bf16[32,128], index: 5, kind: input, shape index: {}]
  %s6 = inlined_call_operand.vmem [shape: bf16[32,128], index: 6, kind: input, shape index: {}]
  %s7 = inlined_call_operand.vmem [shape: bf16[32,128], index: 7, kind: input, shape index: {}]
  %s8 = inlined_call_operand.vmem [shape: f32[1,128], index: 8, kind: input, shape index: {}]
  %s9 = inlined_call_operand.vmem [shape: bf16[128,32], index: 9, kind: input, shape index: {}]
  %s10 = inlined_call_operand.vmem [shape: f32[1,32], index: 10, kind: input, shape index: {}]
  %s11 = inlined_call_operand.vmem [shape: bf16[128,32], index: 11, kind: output, shape index: {}]
  %s12 = sld [smem:[#allocation0]]
  $region54: #{tpu_custom_call.1} parent=0
    _
  %s14 = ssub.s32 1, %s12
  %s15 = scalar_select 0, %s14, %s12
  // Predicated region
  $region2: #{tpu_custom_call.1} parent=0 // pred_check
    _
  $region3: #{tpu_custom_call.1} parent=0 // pred_check_branch
    %17 = sbr.rel (0) target = $region5
  $region4: #{tpu_custom_call.1} parent=0 // pred_region
    _
  $region5: #{tpu_custom_call.1} parent=0 // pred_fallthru
    _
  // Predicated region
  $region6: #{tpu_custom_call.1} parent=0 // pred_check
    _
  $region7: #{tpu_custom_call.1} parent=0 // pred_check_branch
    %19 = sbr.rel (0) target = $region9
  $region8: #{tpu_custom_call.1} parent=0 // pred_region
    _
  $region9: #{tpu_custom_call.1} parent=0 // pred_fallthru
    _
  // Predicated region
  $region10: #{tpu_custom_call.1} parent=0 // pred_check
    _
  $region11: #{tpu_custom_call.1} parent=0 // pred_check_branch
    %21 = sbr.rel (0) target = $region13
  $region12: #{tpu_custom_call.1} parent=0 // pred_region
    _
  $region13: #{tpu_custom_call.1} parent=0 // pred_fallthru
    _
  // Predicated region
  $region14: #{tpu_custom_call.1} parent=0 // pred_check
    _
  $region15: #{tpu_custom_call.1} parent=0 // pred_check_branch
    %23 = sbr.rel (0) target = $region17
  $region16: #{tpu_custom_call.1} parent=0 // pred_region
    _
  $region17: #{tpu_custom_call.1} parent=0 // pred_fallthru
    _
  // Predicated region
  $region18: #{tpu_custom_call.1} parent=0 // pred_check
    _
  $region19: #{tpu_custom_call.1} parent=0 // pred_check_branch
    %25 = sbr.rel (0) target = $region21
  $region20: #{tpu_custom_call.1} parent=0 // pred_region
    _
  $region21: #{tpu_custom_call.1} parent=0 // pred_fallthru
    _
  // Predicated region
  $region22: #{tpu_custom_call.1} parent=0 // pred_check
    _
  $region23: #{tpu_custom_call.1} parent=0 // pred_check_branch
    %27 = sbr.rel (0) target = $region25
  $region24: #{tpu_custom_call.1} parent=0 // pred_region
    _
  $region25: #{tpu_custom_call.1} parent=0 // pred_fallthru
    _
  // Predicated region
  $region26: #{tpu_custom_call.1} parent=0 // pred_check
    _
  $region27: #{tpu_custom_call.1} parent=0 // pred_check_branch
    %29 = sbr.rel (0) target = $region29
  $region28: #{tpu_custom_call.1} parent=0 // pred_region
    _
  $region29: #{tpu_custom_call.1} parent=0 // pred_fallthru
    _
  // Predicated region
  $region30: #{tpu_custom_call.1} parent=0 // pred_check
    _
  $region31: #{tpu_custom_call.1} parent=0 // pred_check_branch
    %31 = sbr.rel (0) target = $region33
  $region32: #{tpu_custom_call.1} parent=0 // pred_region
    _
  $region33: #{tpu_custom_call.1} parent=0 // pred_fallthru
    _
  // Predicated region
  $region34: #{tpu_custom_call.1} parent=0 // pred_check
    _
  $region35: #{tpu_custom_call.1} parent=0 // pred_check_branch
    %33 = sbr.rel (0) target = $region37
  $region36: #{tpu_custom_call.1} parent=0 // pred_region
    _
  $region37: #{tpu_custom_call.1} parent=0 // pred_fallthru
    _
  // Predicated region
  $region38: #{tpu_custom_call.1} parent=0 // pred_check
    _
  $region39: #{tpu_custom_call.1} parent=0 // pred_check_branch
    %35 = sbr.rel (0) target = $region41
  $region40: #{tpu_custom_call.1} parent=0 // pred_region
    _
  $region41: #{tpu_custom_call.1} parent=0 // pred_fallthru
    _
  // Predicated region
  $region42: #{tpu_custom_call.1} parent=0 // pred_check
    _
  $region43: #{tpu_custom_call.1} parent=0 // pred_check_branch
    %37 = sbr.rel (0) target = $region45
  $region44: #{tpu_custom_call.1} parent=0 // pred_region
    _
  $region45: #{tpu_custom_call.1} parent=0 // pred_fallthru
    _
  %v39 = vld [vmem:[%s0] sm:$0xf]
  %v40 = vld [vmem:[%s0 + $0x4] sm:$0xf]
  %v41 = vld [vmem:[%s0 + $0x8] sm:$0xf]
  %v42 = vld [vmem:[%s0 + $0xc] sm:$0xf]
  %v43 = vld [vmem:[%s0 + $0x10] sm:$0xf]
  %v44 = vld [vmem:[%s0 + $0x14] sm:$0xf]
  %v45 = vld [vmem:[%s0 + $0x18] sm:$0xf]
  %v46 = vld [vmem:[%s0 + $0x1c] sm:$0xf]
  %v47 = vld [vmem:[%s0 + $0x20] sm:$0xf]
  %v48 = vld [vmem:[%s0 + $0x24] sm:$0xf]
  %v49 = vld [vmem:[%s0 + $0x28] sm:$0xf]
  %v50 = vld [vmem:[%s0 + $0x2c] sm:$0xf]
  %v51 = vld [vmem:[%s0 + $0x30] sm:$0xf]
  %v52 = vld [vmem:[%s0 + $0x34] sm:$0xf]
  %v53 = vld [vmem:[%s0 + $0x38] sm:$0xf]
  %v54 = vld [vmem:[%s0 + $0x3c] sm:$0xf]
  %v55 = vld [vmem:[%s4] sm:$0xf]
  %v56 = vld [vmem:[%s4 + $0x4] sm:$0xf]
  %v57 = vld [vmem:[%s4 + $0x8] sm:$0xf]
  %v58 = vld [vmem:[%s4 + $0xc] sm:$0xf]
  %v59 = vld [vmem:[%s1] sm:$0xf]
  %v60 = vld [vmem:[%s1 + $0x4] sm:$0xf]
  %v61 = vld [vmem:[%s1 + $0x8] sm:$0xf]
  %v62 = vld [vmem:[%s1 + $0xc] sm:$0xf]
  %v63 = vld [vmem:[%s1 + $0x10] sm:$0xf]
  %v64 = vld [vmem:[%s1 + $0x14] sm:$0xf]
  %v65 = vld [vmem:[%s1 + $0x18] sm:$0xf]
  %v66 = vld [vmem:[%s1 + $0x1c] sm:$0xf]
  %v67 = vld [vmem:[%s1 + $0x20] sm:$0xf]
  %v68 = vld [vmem:[%s1 + $0x24] sm:$0xf]
  %v69 = vld [vmem:[%s1 + $0x28] sm:$0xf]
  %v70 = vld [vmem:[%s1 + $0x2c] sm:$0xf]
  %v71 = vld [vmem:[%s1 + $0x30] sm:$0xf]
  %v72 = vld [vmem:[%s1 + $0x34] sm:$0xf]
  %v73 = vld [vmem:[%s1 + $0x38] sm:$0xf]
  %v74 = vld [vmem:[%s1 + $0x3c] sm:$0xf]
  %v75 = vld [vmem:[%s5] sm:$0xf]
  %v76 = vld [vmem:[%s5 + $0x4] sm:$0xf]
  %v77 = vld [vmem:[%s5 + $0x8] sm:$0xf]
  %v78 = vld [vmem:[%s5 + $0xc] sm:$0xf]
  %v95 = vunpack.c.l.b16 %v59
  %v96 = vunpack.c.l.b16 %v60
  %v97 = vunpack.c.l.b16 %v61
  %v98 = vunpack.c.l.b16 %v62
  %v99 = vunpack.c.l.b16 %v63
  %v100 = vunpack.c.l.b16 %v64
  %v101 = vunpack.c.l.b16 %v65
  %v102 = vunpack.c.l.b16 %v66
  %v103 = vunpack.c.l.b16 %v67
  %v104 = vunpack.c.l.b16 %v68
  %v105 = vunpack.c.l.b16 %v69
  %v106 = vunpack.c.l.b16 %v70
  %v107 = vunpack.c.l.b16 %v71
  %v108 = vunpack.c.l.b16 %v72
  %v109 = vunpack.c.l.b16 %v73
  %v110 = vunpack.c.l.b16 %v74
  %v111 = vpack.c.b16 %v96, %v95
  %v112 = vpack.c.b16 %v98, %v97
  %v113 = vpack.c.b16 %v100, %v99
  %v114 = vpack.c.b16 %v102, %v101
  %v115 = vpack.c.b16 %v104, %v103
  %v116 = vpack.c.b16 %v106, %v105
  %v117 = vpack.c.b16 %v108, %v107
  %v118 = vpack.c.b16 %v110, %v109
  %v123 = vunpack.c.l.b16 %v75
  %v124 = vunpack.c.l.b16 %v76
  %v125 = vunpack.c.l.b16 %v77
  %v126 = vunpack.c.l.b16 %v78
  %v127 = vpack.c.b16 %v124, %v123
  %v128 = vpack.c.b16 %v126, %v125
  %vm131 = vcmask 261120
  %v133 = vsel %vm131, %v111, 0
  %v136 = vsel %vm131, %v112, 0
  %v139 = vsel %vm131, %v113, 0
  %v142 = vsel %vm131, %v114, 0
  %v145 = vsel %vm131, %v115, 0
  %v148 = vsel %vm131, %v116, 0
  %v151 = vsel %vm131, %v117, 0
  %v154 = vsel %vm131, %v118, 0
  %156 = vmatprep.subr.bf16.mxu0 0
  %157 = vmatpush1.bf16.msra.mxu0 %v127
  %158 = vmatprep.subr.bf16.mxu0 0
  %159 = vmatpush1.bf16.msra.mxu0 %v128
  %160 = vmatprep.subr.bf16.mxu0 0
  %161 = vmatpush1.bf16.msra.mxu0 0
  %162 = vmatprep.subr.bf16.mxu0 0
  %163 = vmatpush1.bf16.msra.mxu0 0
  %164 = vmatprep.subr.bf16.mxu0 0
  %165 = vmatpush1.bf16.msra.mxu0 0
  %166 = vmatprep.subr.bf16.mxu0 0
  %167 = vmatpush1.bf16.msra.mxu0 0
  %168 = vmatprep.subr.bf16.mxu0 0
  %169 = vmatpush1.bf16.msra.mxu0 0
  %170 = vmatprep.subr.bf16.mxu0 0
  %171 = vmatpush1.bf16.msra.mxu0 0
  %172 = vmatprep.subr.bf16.mxu0 0
  %173 = vmatpush1.bf16.msra.mxu0 0
  %174 = vmatprep.subr.bf16.mxu0 0
  %175 = vmatpush1.bf16.msra.mxu0 0
  %176 = vmatprep.subr.bf16.mxu0 0
  %177 = vmatpush1.bf16.msra.mxu0 0
  %178 = vmatprep.subr.bf16.mxu0 0
  %179 = vmatpush1.bf16.msra.mxu0 0
  %180 = vmatprep.subr.bf16.mxu0 0
  %181 = vmatpush1.bf16.msra.mxu0 0
  %182 = vmatprep.subr.bf16.mxu0 0
  %183 = vmatpush1.bf16.msra.mxu0 0
  %184 = vmatprep.subr.bf16.mxu0 0
  %185 = vmatpush1.bf16.msra.mxu0 0
  %186 = vmatprep.subr.bf16.mxu0 0
  %187 = vmatpush1.bf16.msra.mxu0 0
  %188 = vmatprep.mubr.bf16.mxu0 0
  %189 = vmatmul.mubr.bf16.gmra.mrb[0].mxu0 %v133
  %v190 = vpop.f32.mrb[0].mxu0
  %v191 = vadd.f32 0.0, %v190
  %v192 = vpop.f32.mrb[0].mxu0
  %v193 = vpop.f32.mrb[0].mxu0
  %v194 = vadd.f32 0.0, %v193
  %v195 = vpop.f32.mrb[0].mxu0
  %196 = vmatprep.mubr.bf16.mxu0 0
  %197 = vmatmul.mubr.bf16.gmra.mrb[0].mxu0 %v136
  %v198 = vpop.f32.mrb[0].mxu0
  %v199 = vadd.f32 0.0, %v198
  %v200 = vpop.f32.mrb[0].mxu0
  %v201 = vpop.f32.mrb[0].mxu0
  %v202 = vadd.f32 0.0, %v201
  %v203 = vpop.f32.mrb[0].mxu0
  %204 = vmatprep.mubr.bf16.mxu0 0
  %205 = vmatmul.mubr.bf16.gmra.mrb[0].mxu0 %v139
  %v206 = vpop.f32.mrb[0].mxu0
  %v207 = vadd.f32 0.0, %v206
  %v208 = vpop.f32.mrb[0].mxu0
  %v209 = vpop.f32.mrb[0].mxu0
  %v210 = vadd.f32 0.0, %v209
  %v211 = vpop.f32.mrb[0].mxu0
  %212 = vmatprep.mubr.bf16.mxu0 0
  %213 = vmatmul.mubr.bf16.gmra.mrb[0].mxu0 %v142
  %v214 = vpop.f32.mrb[0].mxu0
  %v215 = vadd.f32 0.0, %v214
  %v216 = vpop.f32.mrb[0].mxu0
  %v217 = vpop.f32.mrb[0].mxu0
  %v218 = vadd.f32 0.0, %v217
  %v219 = vpop.f32.mrb[0].mxu0
  %220 = vmatprep.mubr.bf16.mxu0 0
  %221 = vmatmul.mubr.bf16.gmra.mrb[0].mxu0 %v145
  %v222 = vpop.f32.mrb[0].mxu0
  %v223 = vadd.f32 0.0, %v222
  %v224 = vpop.f32.mrb[0].mxu0
  %v225 = vpop.f32.mrb[0].mxu0
  %v226 = vadd.f32 0.0, %v225
  %v227 = vpop.f32.mrb[0].mxu0
  %228 = vmatprep.mubr.bf16.mxu0 0
  %229 = vmatmul.mubr.bf16.gmra.mrb[0].mxu0 %v148
  %v230 = vpop.f32.mrb[0].mxu0
  %v231 = vadd.f32 0.0, %v230
  %v232 = vpop.f32.mrb[0].mxu0
  %v233 = vpop.f32.mrb[0].mxu0
  %v234 = vadd.f32 0.0, %v233
  %v235 = vpop.f32.mrb[0].mxu0
  %236 = vmatprep.mubr.bf16.mxu0 0
  %237 = vmatmul.mubr.bf16.gmra.mrb[0].mxu0 %v151
  %v238 = vpop.f32.mrb[0].mxu0
  %v239 = vadd.f32 0.0, %v238
  %v240 = vpop.f32.mrb[0].mxu0
  %v241 = vpop.f32.mrb[0].mxu0
  %v242 = vadd.f32 0.0, %v241
  %v243 = vpop.f32.mrb[0].mxu0
  %244 = vmatprep.mubr.bf16.mxu0 0
  %245 = vmatmul.mubr.bf16.gmra.mrb[0].mxu0 %v154
  %v246 = vpop.f32.mrb[0].mxu0
  %v247 = vadd.f32 0.0, %v246
  %v248 = vpop.f32.mrb[0].mxu0
  %v249 = vpop.f32.mrb[0].mxu0
  %v250 = vadd.f32 0.0, %v249
  %v251 = vpop.f32.mrb[0].mxu0
  %252 = vdwg.mxu0
  %v269 = vunpack.c.l.b16 %v39
  %v270 = vunpack.c.l.b16 %v40
  %v271 = vunpack.c.l.b16 %v41
  %v272 = vunpack.c.l.b16 %v42
  %v273 = vunpack.c.l.b16 %v43
  %v274 = vunpack.c.l.b16 %v44
  %v275 = vunpack.c.l.b16 %v45
  %v276 = vunpack.c.l.b16 %v46
  %v277 = vunpack.c.l.b16 %v47
  %v278 = vunpack.c.l.b16 %v48
  %v279 = vunpack.c.l.b16 %v49
  %v280 = vunpack.c.l.b16 %v50
  %v281 = vunpack.c.l.b16 %v51
  %v282 = vunpack.c.l.b16 %v52
  %v283 = vunpack.c.l.b16 %v53
  %v284 = vunpack.c.l.b16 %v54
  %v285 = vpack.c.b16 %v270, %v269
  %v286 = vpack.c.b16 %v272, %v271
  %v287 = vpack.c.b16 %v274, %v273
  %v288 = vpack.c.b16 %v276, %v275
  %v289 = vpack.c.b16 %v278, %v277
  %v290 = vpack.c.b16 %v280, %v279
  %v291 = vpack.c.b16 %v282, %v281
  %v292 = vpack.c.b16 %v284, %v283
  %v297 = vunpack.c.l.b16 %v55
  %v298 = vunpack.c.l.b16 %v56
  %v299 = vunpack.c.l.b16 %v57
  %v300 = vunpack.c.l.b16 %v58
  %v301 = vpack.c.b16 %v298, %v297
  %v302 = vpack.c.b16 %v300, %v299
  %v306 = vsel %vm131, %v285, 0
  %v309 = vsel %vm131, %v286, 0
  %v312 = vsel %vm131, %v287, 0
  %v315 = vsel %vm131, %v288, 0
  %v318 = vsel %vm131, %v289, 0
  %v321 = vsel %vm131, %v290, 0
  %v324 = vsel %vm131, %v291, 0
  %v327 = vsel %vm131, %v292, 0
  %329 = vmatprep.subr.bf16.mxu0 0
  %330 = vmatpush1.bf16.msra.mxu0 %v301
  %331 = vmatprep.subr.bf16.mxu0 0
  %332 = vmatpush1.bf16.msra.mxu0 %v302
  %333 = vmatprep.subr.bf16.mxu0 0
  %334 = vmatpush1.bf16.msra.mxu0 0
  %335 = vmatprep.subr.bf16.mxu0 0
  %336 = vmatpush1.bf16.msra.mxu0 0
  %337 = vmatprep.subr.bf16.mxu0 0
  %338 = vmatpush1.bf16.msra.mxu0 0
  %339 = vmatprep.subr.bf16.mxu0 0
  %340 = vmatpush1.bf16.msra.mxu0 0
  %341 = vmatprep.subr.bf16.mxu0 0
  %342 = vmatpush1.bf16.msra.mxu0 0
  %343 = vmatprep.subr.bf16.mxu0 0
  %344 = vmatpush1.bf16.msra.mxu0 0
  %345 = vmatprep.subr.bf16.mxu0 0
  %346 = vmatpush1.bf16.msra.mxu0 0
  %347 = vmatprep.subr.bf16.mxu0 0
  %348 = vmatpush1.bf16.msra.mxu0 0
  %349 = vmatprep.subr.bf16.mxu0 0
  %350 = vmatpush1.bf16.msra.mxu0 0
  %351 = vmatprep.subr.bf16.mxu0 0
  %352 = vmatpush1.bf16.msra.mxu0 0
  %353 = vmatprep.subr.bf16.mxu0 0
  %354 = vmatpush1.bf16.msra.mxu0 0
  %355 = vmatprep.subr.bf16.mxu0 0
  %356 = vmatpush1.bf16.msra.mxu0 0
  %357 = vmatprep.subr.bf16.mxu0 0
  %358 = vmatpush1.bf16.msra.mxu0 0
  %359 = vmatprep.subr.bf16.mxu0 0
  %360 = vmatpush1.bf16.msra.mxu0 0
  %361 = vmatprep.mubr.bf16.mxu0 0
  %362 = vmatmul.mubr.bf16.gmra.mrb[0].mxu0 %v306
  %v363 = vpop.f32.mrb[0].mxu0
  %v364 = vadd.f32 %v191, %v363
  %v365 = vpop.f32.mrb[0].mxu0
  %v366 = vpop.f32.mrb[0].mxu0
  %v367 = vadd.f32 %v194, %v366
  %v368 = vpop.f32.mrb[0].mxu0
  %369 = vmatprep.mubr.bf16.mxu0 0
  %370 = vmatmul.mubr.bf16.gmra.mrb[0].mxu0 %v309
  %v371 = vpop.f32.mrb[0].mxu0
  %v372 = vadd.f32 %v199, %v371
  %v373 = vpop.f32.mrb[0].mxu0
  %v374 = vpop.f32.mrb[0].mxu0
  %v375 = vadd.f32 %v202, %v374
  %v376 = vpop.f32.mrb[0].mxu0
  %377 = vmatprep.mubr.bf16.mxu0 0
  %378 = vmatmul.mubr.bf16.gmra.mrb[0].mxu0 %v312
  %v379 = vpop.f32.mrb[0].mxu0
  %v380 = vadd.f32 %v207, %v379
  %v381 = vpop.f32.mrb[0].mxu0
  %v382 = vpop.f32.mrb[0].mxu0
  %v383 = vadd.f32 %v210, %v382
  %v384 = vpop.f32.mrb[0].mxu0
  %385 = vmatprep.mubr.bf16.mxu0 0
  %386 = vmatmul.mubr.bf16.gmra.mrb[0].mxu0 %v315
  %v387 = vpop.f32.mrb[0].mxu0
  %v388 = vadd.f32 %v215, %v387
  %v389 = vpop.f32.mrb[0].mxu0
  %v390 = vpop.f32.mrb[0].mxu0
  %v391 = vadd.f32 %v218, %v390
  %v392 = vpop.f32.mrb[0].mxu0
  %393 = vmatprep.mubr.bf16.mxu0 0
  %394 = vmatmul.mubr.bf16.gmra.mrb[0].mxu0 %v318
  %v395 = vpop.f32.mrb[0].mxu0
  %v396 = vadd.f32 %v223, %v395
  %v397 = vpop.f32.mrb[0].mxu0
  %v398 = vpop.f32.mrb[0].mxu0
  %v399 = vadd.f32 %v226, %v398
  %v400 = vpop.f32.mrb[0].mxu0
  %401 = vmatprep.mubr.bf16.mxu0 0
  %402 = vmatmul.mubr.bf16.gmra.mrb[0].mxu0 %v321
  %v403 = vpop.f32.mrb[0].mxu0
  %v404 = vadd.f32 %v231, %v403
  %v405 = vpop.f32.mrb[0].mxu0
  %v406 = vpop.f32.mrb[0].mxu0
  %v407 = vadd.f32 %v234, %v406
  %v408 = vpop.f32.mrb[0].mxu0
  %409 = vmatprep.mubr.bf16.mxu0 0
  %410 = vmatmul.mubr.bf16.gmra.mrb[0].mxu0 %v324
  %v411 = vpop.f32.mrb[0].mxu0
  %v412 = vadd.f32 %v239, %v411
  %v413 = vpop.f32.mrb[0].mxu0
  %v414 = vpop.f32.mrb[0].mxu0
  %v415 = vadd.f32 %v242, %v414
  %v416 = vpop.f32.mrb[0].mxu0
  %417 = vmatprep.mubr.bf16.mxu0 0
  %418 = vmatmul.mubr.bf16.gmra.mrb[0].mxu0 %v327
  %v419 = vpop.f32.mrb[0].mxu0
  %v420 = vadd.f32 %v247, %v419
  %v421 = vpop.f32.mrb[0].mxu0
  %v422 = vpop.f32.mrb[0].mxu0
  %v423 = vadd.f32 %v250, %v422
  %v424 = vpop.f32.mrb[0].mxu0
  %425 = vdwg.mxu0
  %v426 = vld [vmem:[%s2] sm:$0xf]
  %v427 = vld [vmem:[%s2 + $0x4] sm:$0xf]
  %v428 = vld [vmem:[%s2 + $0x8] sm:$0xf]
  %v429 = vld [vmem:[%s2 + $0xc] sm:$0xf]
  %v430 = vld [vmem:[%s2 + $0x10] sm:$0xf]
  %v431 = vld [vmem:[%s2 + $0x14] sm:$0xf]
  %v432 = vld [vmem:[%s2 + $0x18] sm:$0xf]
  %v433 = vld [vmem:[%s2 + $0x1c] sm:$0xf]
  %v434 = vld [vmem:[%s2 + $0x20] sm:$0xf]
  %v435 = vld [vmem:[%s2 + $0x24] sm:$0xf]
  %v436 = vld [vmem:[%s2 + $0x28] sm:$0xf]
  %v437 = vld [vmem:[%s2 + $0x2c] sm:$0xf]
  %v438 = vld [vmem:[%s2 + $0x30] sm:$0xf]
  %v439 = vld [vmem:[%s2 + $0x34] sm:$0xf]
  %v440 = vld [vmem:[%s2 + $0x38] sm:$0xf]
  %v441 = vld [vmem:[%s2 + $0x3c] sm:$0xf]
  %v442 = vld [vmem:[%s6] sm:$0xf]
  %v443 = vld [vmem:[%s6 + $0x4] sm:$0xf]
  %v444 = vld [vmem:[%s6 + $0x8] sm:$0xf]
  %v445 = vld [vmem:[%s6 + $0xc] sm:$0xf]
  %v462 = vunpack.c.l.b16 %v426
  %v463 = vunpack.c.l.b16 %v427
  %v464 = vunpack.c.l.b16 %v428
  %v465 = vunpack.c.l.b16 %v429
  %v466 = vunpack.c.l.b16 %v430
  %v467 = vunpack.c.l.b16 %v431
  %v468 = vunpack.c.l.b16 %v432
  %v469 = vunpack.c.l.b16 %v433
  %v470 = vunpack.c.l.b16 %v434
  %v471 = vunpack.c.l.b16 %v435
  %v472 = vunpack.c.l.b16 %v436
  %v473 = vunpack.c.l.b16 %v437
  %v474 = vunpack.c.l.b16 %v438
  %v475 = vunpack.c.l.b16 %v439
  %v476 = vunpack.c.l.b16 %v440
  %v477 = vunpack.c.l.b16 %v441
  %v478 = vpack.c.b16 %v463, %v462
  %v479 = vpack.c.b16 %v465, %v464
  %v480 = vpack.c.b16 %v467, %v466
  %v481 = vpack.c.b16 %v469, %v468
  %v482 = vpack.c.b16 %v471, %v470
  %v483 = vpack.c.b16 %v473, %v472
  %v484 = vpack.c.b16 %v475, %v474
  %v485 = vpack.c.b16 %v477, %v476
  %v490 = vunpack.c.l.b16 %v442
  %v491 = vunpack.c.l.b16 %v443
  %v492 = vunpack.c.l.b16 %v444
  %v493 = vunpack.c.l.b16 %v445
  %v494 = vpack.c.b16 %v491, %v490
  %v495 = vpack.c.b16 %v493, %v492
  %v499 = vsel %vm131, %v478, 0
  %v502 = vsel %vm131, %v479, 0
  %v505 = vsel %vm131, %v480, 0
  %v508 = vsel %vm131, %v481, 0
  %v511 = vsel %vm131, %v482, 0
  %v514 = vsel %vm131, %v483, 0
  %v517 = vsel %vm131, %v484, 0
  %v520 = vsel %vm131, %v485, 0
  %522 = vmatprep.subr.bf16.mxu0 0
  %523 = vmatpush1.bf16.msra.mxu0 %v494
  %524 = vmatprep.subr.bf16.mxu0 0
  %525 = vmatpush1.bf16.msra.mxu0 %v495
  %526 = vmatprep.subr.bf16.mxu0 0
  %527 = vmatpush1.bf16.msra.mxu0 0
  %528 = vmatprep.subr.bf16.mxu0 0
  %529 = vmatpush1.bf16.msra.mxu0 0
  %530 = vmatprep.subr.bf16.mxu0 0
  %531 = vmatpush1.bf16.msra.mxu0 0
  %532 = vmatprep.subr.bf16.mxu0 0
  %533 = vmatpush1.bf16.msra.mxu0 0
  %534 = vmatprep.subr.bf16.mxu0 0
  %535 = vmatpush1.bf16.msra.mxu0 0
  %536 = vmatprep.subr.bf16.mxu0 0
  %537 = vmatpush1.bf16.msra.mxu0 0
  %538 = vmatprep.subr.bf16.mxu0 0
  %539 = vmatpush1.bf16.msra.mxu0 0
  %540 = vmatprep.subr.bf16.mxu0 0
  %541 = vmatpush1.bf16.msra.mxu0 0
  %542 = vmatprep.subr.bf16.mxu0 0
  %543 = vmatpush1.bf16.msra.mxu0 0
  %544 = vmatprep.subr.bf16.mxu0 0
  %545 = vmatpush1.bf16.msra.mxu0 0
  %546 = vmatprep.subr.bf16.mxu0 0
  %547 = vmatpush1.bf16.msra.mxu0 0
  %548 = vmatprep.subr.bf16.mxu0 0
  %549 = vmatpush1.bf16.msra.mxu0 0
  %550 = vmatprep.subr.bf16.mxu0 0
  %551 = vmatpush1.bf16.msra.mxu0 0
  %552 = vmatprep.subr.bf16.mxu0 0
  %553 = vmatpush1.bf16.msra.mxu0 0
  %554 = vmatprep.mubr.bf16.mxu0 0
  %555 = vmatmul.mubr.bf16.gmra.mrb[0].mxu0 %v499
  %v556 = vpop.f32.mrb[0].mxu0
  %v557 = vadd.f32 0.0, %v556
  %v558 = vpop.f32.mrb[0].mxu0
  %v559 = vpop.f32.mrb[0].mxu0
  %v560 = vadd.f32 0.0, %v559
  %v561 = vpop.f32.mrb[0].mxu0
  %562 = vmatprep.mubr.bf16.mxu0 0
  %563 = vmatmul.mubr.bf16.gmra.mrb[0].mxu0 %v502
  %v564 = vpop.f32.mrb[0].mxu0
  %v565 = vadd.f32 0.0, %v564
  %v566 = vpop.f32.mrb[0].mxu0
  %v567 = vpop.f32.mrb[0].mxu0
  %v568 = vadd.f32 0.0, %v567
  %v569 = vpop.f32.mrb[0].mxu0
  %570 = vmatprep.mubr.bf16.mxu0 0
  %571 = vmatmul.mubr.bf16.gmra.mrb[0].mxu0 %v505
  %v572 = vpop.f32.mrb[0].mxu0
  %v573 = vadd.f32 0.0, %v572
  %v574 = vpop.f32.mrb[0].mxu0
  %v575 = vpop.f32.mrb[0].mxu0
  %v576 = vadd.f32 0.0, %v575
  %v577 = vpop.f32.mrb[0].mxu0
  %578 = vmatprep.mubr.bf16.mxu0 0
  %579 = vmatmul.mubr.bf16.gmra.mrb[0].mxu0 %v508
  %v580 = vpop.f32.mrb[0].mxu0
  %v581 = vadd.f32 0.0, %v580
  %v582 = vpop.f32.mrb[0].mxu0
  %v583 = vpop.f32.mrb[0].mxu0
  %v584 = vadd.f32 0.0, %v583
  %v585 = vpop.f32.mrb[0].mxu0
  %586 = vmatprep.mubr.bf16.mxu0 0
  %587 = vmatmul.mubr.bf16.gmra.mrb[0].mxu0 %v511
  %v588 = vpop.f32.mrb[0].mxu0
  %v589 = vadd.f32 0.0, %v588
  %v590 = vpop.f32.mrb[0].mxu0
  %v591 = vpop.f32.mrb[0].mxu0
  %v592 = vadd.f32 0.0, %v591
  %v593 = vpop.f32.mrb[0].mxu0
  %594 = vmatprep.mubr.bf16.mxu0 0
  %595 = vmatmul.mubr.bf16.gmra.mrb[0].mxu0 %v514
  %v596 = vpop.f32.mrb[0].mxu0
  %v597 = vadd.f32 0.0, %v596
  %v598 = vpop.f32.mrb[0].mxu0
  %v599 = vpop.f32.mrb[0].mxu0
  %v600 = vadd.f32 0.0, %v599
  %v601 = vpop.f32.mrb[0].mxu0
  %602 = vmatprep.mubr.bf16.mxu0 0
  %603 = vmatmul.mubr.bf16.gmra.mrb[0].mxu0 %v517
  %v604 = vpop.f32.mrb[0].mxu0
  %v605 = vadd.f32 0.0, %v604
  %v606 = vpop.f32.mrb[0].mxu0
  %v607 = vpop.f32.mrb[0].mxu0
  %v608 = vadd.f32 0.0, %v607
  %v609 = vpop.f32.mrb[0].mxu0
  %610 = vmatprep.mubr.bf16.mxu0 0
  %611 = vmatmul.mubr.bf16.gmra.mrb[0].mxu0 %v520
  %v612 = vpop.f32.mrb[0].mxu0
  %v613 = vadd.f32 0.0, %v612
  %v614 = vpop.f32.mrb[0].mxu0
  %v615 = vpop.f32.mrb[0].mxu0
  %v616 = vadd.f32 0.0, %v615
  %v617 = vpop.f32.mrb[0].mxu0
  %618 = vdwg.mxu0
  %v619 = vadd.f32 %v364, %v557
  %v620 = vadd.f32 %v367, %v560
  %v621 = vadd.f32 %v372, %v565
  %v622 = vadd.f32 %v375, %v568
  %v623 = vadd.f32 %v380, %v573
  %v624 = vadd.f32 %v383, %v576
  %v625 = vadd.f32 %v388, %v581
  %v626 = vadd.f32 %v391, %v584
  %v627 = vadd.f32 %v396, %v589
  %v628 = vadd.f32 %v399, %v592
  %v629 = vadd.f32 %v404, %v597
  %v630 = vadd.f32 %v407, %v600
  %v631 = vadd.f32 %v412, %v605
  %v632 = vadd.f32 %v415, %v608
  %v633 = vadd.f32 %v420, %v613
  %v634 = vadd.f32 %v423, %v616
  %v635 = vld [vmem:[%s3] sm:$0xf]
  %v636 = vld [vmem:[%s3 + $0x4] sm:$0xf]
  %v637 = vld [vmem:[%s3 + $0x8] sm:$0xf]
  %v638 = vld [vmem:[%s3 + $0xc] sm:$0xf]
  %v639 = vld [vmem:[%s3 + $0x10] sm:$0xf]
  %v640 = vld [vmem:[%s3 + $0x14] sm:$0xf]
  %v641 = vld [vmem:[%s3 + $0x18] sm:$0xf]
  %v642 = vld [vmem:[%s3 + $0x1c] sm:$0xf]
  %v643 = vld [vmem:[%s3 + $0x20] sm:$0xf]
  %v644 = vld [vmem:[%s3 + $0x24] sm:$0xf]
  %v645 = vld [vmem:[%s3 + $0x28] sm:$0xf]
  %v646 = vld [vmem:[%s3 + $0x2c] sm:$0xf]
  %v647 = vld [vmem:[%s3 + $0x30] sm:$0xf]
  %v648 = vld [vmem:[%s3 + $0x34] sm:$0xf]
  %v649 = vld [vmem:[%s3 + $0x38] sm:$0xf]
  %v650 = vld [vmem:[%s3 + $0x3c] sm:$0xf]
  %v651 = vld [vmem:[%s7] sm:$0xf]
  %v652 = vld [vmem:[%s7 + $0x4] sm:$0xf]
  %v653 = vld [vmem:[%s7 + $0x8] sm:$0xf]
  %v654 = vld [vmem:[%s7 + $0xc] sm:$0xf]
  %v671 = vunpack.c.l.b16 %v635
  %v672 = vunpack.c.l.b16 %v636
  %v673 = vunpack.c.l.b16 %v637
  %v674 = vunpack.c.l.b16 %v638
  %v675 = vunpack.c.l.b16 %v639
  %v676 = vunpack.c.l.b16 %v640
  %v677 = vunpack.c.l.b16 %v641
  %v678 = vunpack.c.l.b16 %v642
  %v679 = vunpack.c.l.b16 %v643
  %v680 = vunpack.c.l.b16 %v644
  %v681 = vunpack.c.l.b16 %v645
  %v682 = vunpack.c.l.b16 %v646
  %v683 = vunpack.c.l.b16 %v647
  %v684 = vunpack.c.l.b16 %v648
  %v685 = vunpack.c.l.b16 %v649
  %v686 = vunpack.c.l.b16 %v650
  %v687 = vpack.c.b16 %v672, %v671
  %v688 = vpack.c.b16 %v674, %v673
  %v689 = vpack.c.b16 %v676, %v675
  %v690 = vpack.c.b16 %v678, %v677
  %v691 = vpack.c.b16 %v680, %v679
  %v692 = vpack.c.b16 %v682, %v681
  %v693 = vpack.c.b16 %v684, %v683
  %v694 = vpack.c.b16 %v686, %v685
  %v699 = vunpack.c.l.b16 %v651
  %v700 = vunpack.c.l.b16 %v652
  %v701 = vunpack.c.l.b16 %v653
  %v702 = vunpack.c.l.b16 %v654
  %v703 = vpack.c.b16 %v700, %v699
  %v704 = vpack.c.b16 %v702, %v701
  %v708 = vsel %vm131, %v687, 0
  %v711 = vsel %vm131, %v688, 0
  %v714 = vsel %vm131, %v689, 0
  %v717 = vsel %vm131, %v690, 0
  %v720 = vsel %vm131, %v691, 0
  %v723 = vsel %vm131, %v692, 0
  %v726 = vsel %vm131, %v693, 0
  %v729 = vsel %vm131, %v694, 0
  %731 = vmatprep.subr.bf16.mxu0 0
  %732 = vmatpush1.bf16.msra.mxu0 %v703
  %733 = vmatprep.subr.bf16.mxu0 0
  %734 = vmatpush1.bf16.msra.mxu0 %v704
  %735 = vmatprep.subr.bf16.mxu0 0
  %736 = vmatpush1.bf16.msra.mxu0 0
  %737 = vmatprep.subr.bf16.mxu0 0
  %738 = vmatpush1.bf16.msra.mxu0 0
  %739 = vmatprep.subr.bf16.mxu0 0
  %740 = vmatpush1.bf16.msra.mxu0 0
  %741 = vmatprep.subr.bf16.mxu0 0
  %742 = vmatpush1.bf16.msra.mxu0 0
  %743 = vmatprep.subr.bf16.mxu0 0
  %744 = vmatpush1.bf16.msra.mxu0 0
  %745 = vmatprep.subr.bf16.mxu0 0
  %746 = vmatpush1.bf16.msra.mxu0 0
  %747 = vmatprep.subr.bf16.mxu0 0
  %748 = vmatpush1.bf16.msra.mxu0 0
  %749 = vmatprep.subr.bf16.mxu0 0
  %750 = vmatpush1.bf16.msra.mxu0 0
  %751 = vmatprep.subr.bf16.mxu0 0
  %752 = vmatpush1.bf16.msra.mxu0 0
  %753 = vmatprep.subr.bf16.mxu0 0
  %754 = vmatpush1.bf16.msra.mxu0 0
  %755 = vmatprep.subr.bf16.mxu0 0
  %756 = vmatpush1.bf16.msra.mxu0 0
  %757 = vmatprep.subr.bf16.mxu0 0
  %758 = vmatpush1.bf16.msra.mxu0 0
  %759 = vmatprep.subr.bf16.mxu0 0
  %760 = vmatpush1.bf16.msra.mxu0 0
  %761 = vmatprep.subr.bf16.mxu0 0
  %762 = vmatpush1.bf16.msra.mxu0 0
  %763 = vmatprep.mubr.bf16.mxu0 0
  %764 = vmatmul.mubr.bf16.gmra.mrb[0].mxu0 %v708
  %v765 = vpop.f32.mrb[0].mxu0
  %v766 = vadd.f32 0.0, %v765
  %v767 = vpop.f32.mrb[0].mxu0
  %v768 = vpop.f32.mrb[0].mxu0
  %v769 = vadd.f32 0.0, %v768
  %v770 = vpop.f32.mrb[0].mxu0
  %771 = vmatprep.mubr.bf16.mxu0 0
  %772 = vmatmul.mubr.bf16.gmra.mrb[0].mxu0 %v711
  %v773 = vpop.f32.mrb[0].mxu0
  %v774 = vadd.f32 0.0, %v773
  %v775 = vpop.f32.mrb[0].mxu0
  %v776 = vpop.f32.mrb[0].mxu0
  %v777 = vadd.f32 0.0, %v776
  %v778 = vpop.f32.mrb[0].mxu0
  %779 = vmatprep.mubr.bf16.mxu0 0
  %780 = vmatmul.mubr.bf16.gmra.mrb[0].mxu0 %v714
  %v781 = vpop.f32.mrb[0].mxu0
  %v782 = vadd.f32 0.0, %v781
  %v783 = vpop.f32.mrb[0].mxu0
  %v784 = vpop.f32.mrb[0].mxu0
  %v785 = vadd.f32 0.0, %v784
  %v786 = vpop.f32.mrb[0].mxu0
  %787 = vmatprep.mubr.bf16.mxu0 0
  %788 = vmatmul.mubr.bf16.gmra.mrb[0].mxu0 %v717
  %v789 = vpop.f32.mrb[0].mxu0
  %v790 = vadd.f32 0.0, %v789
  %v791 = vpop.f32.mrb[0].mxu0
  %v792 = vpop.f32.mrb[0].mxu0
  %v793 = vadd.f32 0.0, %v792
  %v794 = vpop.f32.mrb[0].mxu0
  %795 = vmatprep.mubr.bf16.mxu0 0
  %796 = vmatmul.mubr.bf16.gmra.mrb[0].mxu0 %v720
  %v797 = vpop.f32.mrb[0].mxu0
  %v798 = vadd.f32 0.0, %v797
  %v799 = vpop.f32.mrb[0].mxu0
  %v800 = vpop.f32.mrb[0].mxu0
  %v801 = vadd.f32 0.0, %v800
  %v802 = vpop.f32.mrb[0].mxu0
  %803 = vmatprep.mubr.bf16.mxu0 0
  %804 = vmatmul.mubr.bf16.gmra.mrb[0].mxu0 %v723
  %v805 = vpop.f32.mrb[0].mxu0
  %v806 = vadd.f32 0.0, %v805
  %v807 = vpop.f32.mrb[0].mxu0
  %v808 = vpop.f32.mrb[0].mxu0
  %v809 = vadd.f32 0.0, %v808
  %v810 = vpop.f32.mrb[0].mxu0
  %811 = vmatprep.mubr.bf16.mxu0 0
  %812 = vmatmul.mubr.bf16.gmra.mrb[0].mxu0 %v726
  %v813 = vpop.f32.mrb[0].mxu0
  %v814 = vadd.f32 0.0, %v813
  %v815 = vpop.f32.mrb[0].mxu0
  %v816 = vpop.f32.mrb[0].mxu0
  %v817 = vadd.f32 0.0, %v816
  %v818 = vpop.f32.mrb[0].mxu0
  %819 = vmatprep.mubr.bf16.mxu0 0
  %820 = vmatmul.mubr.bf16.gmra.mrb[0].mxu0 %v729
  %v821 = vpop.f32.mrb[0].mxu0
  %v822 = vadd.f32 0.0, %v821
  %v823 = vpop.f32.mrb[0].mxu0
  %v824 = vpop.f32.mrb[0].mxu0
  %v825 = vadd.f32 0.0, %v824
  %v826 = vpop.f32.mrb[0].mxu0
  %827 = vdwg.mxu0
  %v828 = vadd.f32 %v619, %v766
  %v829 = vadd.f32 %v620, %v769
  %v830 = vadd.f32 %v621, %v774
  %v831 = vadd.f32 %v622, %v777
  %v832 = vadd.f32 %v623, %v782
  %v833 = vadd.f32 %v624, %v785
  %v834 = vadd.f32 %v625, %v790
  %v835 = vadd.f32 %v626, %v793
  %v836 = vadd.f32 %v627, %v798
  %v837 = vadd.f32 %v628, %v801
  %v838 = vadd.f32 %v629, %v806
  %v839 = vadd.f32 %v630, %v809
  %v840 = vadd.f32 %v631, %v814
  %v841 = vadd.f32 %v632, %v817
  %v842 = vadd.f32 %v633, %v822
  %v843 = vadd.f32 %v634, %v825
  %v844 = vld [vmem:[%s8] sm:$0x1]
  %v846 = vlaneseq
  %v847 = vshrl.u32 %v846, 7
  %v848 = vsub.s32 0, %v847
  %v849 = vrot.slane %v844, %v848
  %v851 = vadd.f32 %v828, %v849
  %v852 = vadd.f32 %v829, %v849
  %v853 = vadd.f32 %v830, %v849
  %v854 = vadd.f32 %v831, %v849
  %v855 = vadd.f32 %v832, %v849
  %v856 = vadd.f32 %v833, %v849
  %v857 = vadd.f32 %v834, %v849
  %v858 = vadd.f32 %v835, %v849
  %v859 = vadd.f32 %v836, %v849
  %v860 = vadd.f32 %v837, %v849
  %v861 = vadd.f32 %v838, %v849
  %v862 = vadd.f32 %v839, %v849
  %v863 = vadd.f32 %v840, %v849
  %v864 = vadd.f32 %v841, %v849
  %v865 = vadd.f32 %v842, %v849
  %v866 = vadd.f32 %v843, %v849
  %v867 = vmax.f32 %v851, 0.0
  %v868 = vmax.f32 %v852, 0.0
  %v869 = vmax.f32 %v853, 0.0
  %v870 = vmax.f32 %v854, 0.0
  %v871 = vmax.f32 %v855, 0.0
  %v872 = vmax.f32 %v856, 0.0
  %v873 = vmax.f32 %v857, 0.0
  %v874 = vmax.f32 %v858, 0.0
  %v875 = vmax.f32 %v859, 0.0
  %v876 = vmax.f32 %v860, 0.0
  %v877 = vmax.f32 %v861, 0.0
  %v878 = vmax.f32 %v862, 0.0
  %v879 = vmax.f32 %v863, 0.0
  %v880 = vmax.f32 %v864, 0.0
  %v881 = vmax.f32 %v865, 0.0
  %v882 = vmax.f32 %v866, 0.0
  %v883 = vpack.c.bf16 %v868, %v867
  %v884 = vpack.c.bf16 %v870, %v869
  %v885 = vpack.c.bf16 %v872, %v871
  %v886 = vpack.c.bf16 %v874, %v873
  %v887 = vpack.c.bf16 %v876, %v875
  %v888 = vpack.c.bf16 %v878, %v877
  %v889 = vpack.c.bf16 %v880, %v879
  %v890 = vpack.c.bf16 %v882, %v881
  %v891 = vld [vmem:[%s9] sm:$0xf]
  %v892 = vld [vmem:[%s9 + $0x4] sm:$0xf]
  %v893 = vld [vmem:[%s9 + $0x8] sm:$0xf]
  %v894 = vld [vmem:[%s9 + $0xc] sm:$0xf]
  %v895 = vld [vmem:[%s9 + $0x10] sm:$0xf]
  %v896 = vld [vmem:[%s9 + $0x14] sm:$0xf]
  %v897 = vld [vmem:[%s9 + $0x18] sm:$0xf]
  %v898 = vld [vmem:[%s9 + $0x1c] sm:$0xf]
  %v899 = vld [vmem:[%s9 + $0x20] sm:$0xf]
  %v900 = vld [vmem:[%s9 + $0x24] sm:$0xf]
  %v901 = vld [vmem:[%s9 + $0x28] sm:$0xf]
  %v902 = vld [vmem:[%s9 + $0x2c] sm:$0xf]
  %v903 = vld [vmem:[%s9 + $0x30] sm:$0xf]
  %v904 = vld [vmem:[%s9 + $0x34] sm:$0xf]
  %v905 = vld [vmem:[%s9 + $0x38] sm:$0xf]
  %v906 = vld [vmem:[%s9 + $0x3c] sm:$0xf]
  %v907 = vld [vmem:[%s10] sm:$0x1]
  %v909 = vlaneseq
  %v910 = vshrl.u32 %v909, 7
  %v911 = vsub.s32 0, %v910
  %v912 = vrot.slane %v907, %v911
  %v930 = vunpack.c.l.b16 %v891
  %v931 = vunpack.c.l.b16 %v892
  %v932 = vunpack.c.l.b16 %v893
  %v933 = vunpack.c.l.b16 %v894
  %v934 = vunpack.c.l.b16 %v895
  %v935 = vunpack.c.l.b16 %v896
  %v936 = vunpack.c.l.b16 %v897
  %v937 = vunpack.c.l.b16 %v898
  %v938 = vunpack.c.l.b16 %v899
  %v939 = vunpack.c.l.b16 %v900
  %v940 = vunpack.c.l.b16 %v901
  %v941 = vunpack.c.l.b16 %v902
  %v942 = vunpack.c.l.b16 %v903
  %v943 = vunpack.c.l.b16 %v904
  %v944 = vunpack.c.l.b16 %v905
  %v945 = vunpack.c.l.b16 %v906
  %v946 = vpack.c.b16 %v931, %v930
  %v947 = vpack.c.b16 %v933, %v932
  %v948 = vpack.c.b16 %v935, %v934
  %v949 = vpack.c.b16 %v937, %v936
  %v950 = vpack.c.b16 %v939, %v938
  %v951 = vpack.c.b16 %v941, %v940
  %v952 = vpack.c.b16 %v943, %v942
  %v953 = vpack.c.b16 %v945, %v944
  %962 = vmatprep.subr.bf16.mxu0 0
  %963 = vmatpush1.bf16.msra.mxu0 %v946
  %964 = vmatprep.subr.bf16.mxu0 0
  %965 = vmatpush1.bf16.msra.mxu0 %v947
  %966 = vmatprep.subr.bf16.mxu0 0
  %967 = vmatpush1.bf16.msra.mxu0 %v948
  %968 = vmatprep.subr.bf16.mxu0 0
  %969 = vmatpush1.bf16.msra.mxu0 %v949
  %970 = vmatprep.subr.bf16.mxu0 0
  %971 = vmatpush1.bf16.msra.mxu0 %v950
  %972 = vmatprep.subr.bf16.mxu0 0
  %973 = vmatpush1.bf16.msra.mxu0 %v951
  %974 = vmatprep.subr.bf16.mxu0 0
  %975 = vmatpush1.bf16.msra.mxu0 %v952
  %976 = vmatprep.subr.bf16.mxu0 0
  %977 = vmatpush1.bf16.msra.mxu0 %v953
  %978 = vmatprep.subr.bf16.mxu0 0
  %979 = vmatpush1.bf16.msra.mxu0 0
  %980 = vmatprep.subr.bf16.mxu0 0
  %981 = vmatpush1.bf16.msra.mxu0 0
  %982 = vmatprep.subr.bf16.mxu0 0
  %983 = vmatpush1.bf16.msra.mxu0 0
  %984 = vmatprep.subr.bf16.mxu0 0
  %985 = vmatpush1.bf16.msra.mxu0 0
  %986 = vmatprep.subr.bf16.mxu0 0
  %987 = vmatpush1.bf16.msra.mxu0 0
  %988 = vmatprep.subr.bf16.mxu0 0
  %989 = vmatpush1.bf16.msra.mxu0 0
  %990 = vmatprep.subr.bf16.mxu0 0
  %991 = vmatpush1.bf16.msra.mxu0 0
  %992 = vmatprep.subr.bf16.mxu0 0
  %993 = vmatpush1.bf16.msra.mxu0 0
  %994 = vmatprep.mubr.bf16.mxu0 0
  %995 = vmatmul.mubr.bf16.gmra.mrb[0].mxu0 %v883
  %v996 = vpop.f32.mrb[0].mxu0
  %v997 = vadd.f32 %v912, %v996
  %v998 = vpop.f32.mrb[0].mxu0
  %v999 = vpop.f32.mrb[0].mxu0
  %v1000 = vadd.f32 %v912, %v999
  %v1001 = vpop.f32.mrb[0].mxu0
  %1002 = vmatprep.mubr.bf16.mxu0 0
  %1003 = vmatmul.mubr.bf16.gmra.mrb[0].mxu0 %v884
  %v1004 = vpop.f32.mrb[0].mxu0
  %v1005 = vadd.f32 %v912, %v1004
  %v1006 = vpop.f32.mrb[0].mxu0
  %v1007 = vpop.f32.mrb[0].mxu0
  %v1008 = vadd.f32 %v912, %v1007
  %v1009 = vpop.f32.mrb[0].mxu0
  %1010 = vmatprep.mubr.bf16.mxu0 0
  %1011 = vmatmul.mubr.bf16.gmra.mrb[0].mxu0 %v885
  %v1012 = vpop.f32.mrb[0].mxu0
  %v1013 = vadd.f32 %v912, %v1012
  %v1014 = vpop.f32.mrb[0].mxu0
  %v1015 = vpop.f32.mrb[0].mxu0
  %v1016 = vadd.f32 %v912, %v1015
  %v1017 = vpop.f32.mrb[0].mxu0
  %1018 = vmatprep.mubr.bf16.mxu0 0
  %1019 = vmatmul.mubr.bf16.gmra.mrb[0].mxu0 %v886
  %v1020 = vpop.f32.mrb[0].mxu0
  %v1021 = vadd.f32 %v912, %v1020
  %v1022 = vpop.f32.mrb[0].mxu0
  %v1023 = vpop.f32.mrb[0].mxu0
  %v1024 = vadd.f32 %v912, %v1023
  %v1025 = vpop.f32.mrb[0].mxu0
  %1026 = vmatprep.mubr.bf16.mxu0 0
  %1027 = vmatmul.mubr.bf16.gmra.mrb[0].mxu0 %v887
  %v1028 = vpop.f32.mrb[0].mxu0
  %v1029 = vadd.f32 %v912, %v1028
  %v1030 = vpop.f32.mrb[0].mxu0
  %v1031 = vpop.f32.mrb[0].mxu0
  %v1032 = vadd.f32 %v912, %v1031
  %v1033 = vpop.f32.mrb[0].mxu0
  %1034 = vmatprep.mubr.bf16.mxu0 0
  %1035 = vmatmul.mubr.bf16.gmra.mrb[0].mxu0 %v888
  %v1036 = vpop.f32.mrb[0].mxu0
  %v1037 = vadd.f32 %v912, %v1036
  %v1038 = vpop.f32.mrb[0].mxu0
  %v1039 = vpop.f32.mrb[0].mxu0
  %v1040 = vadd.f32 %v912, %v1039
  %v1041 = vpop.f32.mrb[0].mxu0
  %1042 = vmatprep.mubr.bf16.mxu0 0
  %1043 = vmatmul.mubr.bf16.gmra.mrb[0].mxu0 %v889
  %v1044 = vpop.f32.mrb[0].mxu0
  %v1045 = vadd.f32 %v912, %v1044
  %v1046 = vpop.f32.mrb[0].mxu0
  %v1047 = vpop.f32.mrb[0].mxu0
  %v1048 = vadd.f32 %v912, %v1047
  %v1049 = vpop.f32.mrb[0].mxu0
  %1050 = vmatprep.mubr.bf16.mxu0 0
  %1051 = vmatmul.mubr.bf16.gmra.mrb[0].mxu0 %v890
  %v1052 = vpop.f32.mrb[0].mxu0
  %v1053 = vadd.f32 %v912, %v1052
  %v1054 = vpop.f32.mrb[0].mxu0
  %v1055 = vpop.f32.mrb[0].mxu0
  %v1056 = vadd.f32 %v912, %v1055
  %v1057 = vpop.f32.mrb[0].mxu0
  %1058 = vdwg.mxu0
  %v1059 = vpack.c.bf16 %v1000, %v997
  %v1060 = vpack.c.bf16 %v1008, %v1005
  %v1061 = vpack.c.bf16 %v1016, %v1013
  %v1062 = vpack.c.bf16 %v1024, %v1021
  %v1063 = vpack.c.bf16 %v1032, %v1029
  %v1064 = vpack.c.bf16 %v1040, %v1037
  %v1065 = vpack.c.bf16 %v1048, %v1045
  %v1066 = vpack.c.bf16 %v1056, %v1053
  %v1075 = vunpack.c.l.b16 %v1059
  %v1076 = vunpack.c.h.b16 %v1059
  %v1077 = vunpack.c.l.b16 %v1060
  %v1078 = vunpack.c.h.b16 %v1060
  %v1079 = vunpack.c.l.b16 %v1061
  %v1080 = vunpack.c.h.b16 %v1061
  %v1081 = vunpack.c.l.b16 %v1062
  %v1082 = vunpack.c.h.b16 %v1062
  %v1083 = vunpack.c.l.b16 %v1063
  %v1084 = vunpack.c.h.b16 %v1063
  %v1085 = vunpack.c.l.b16 %v1064
  %v1086 = vunpack.c.h.b16 %v1064
  %v1087 = vunpack.c.l.b16 %v1065
  %v1088 = vunpack.c.h.b16 %v1065
  %v1089 = vunpack.c.l.b16 %v1066
  %v1090 = vunpack.c.h.b16 %v1066
  %v1091 = vpack.c.b16 %v1075, %v1075
  %v1092 = vpack.c.b16 %v1076, %v1076
  %v1093 = vpack.c.b16 %v1077, %v1077
  %v1094 = vpack.c.b16 %v1078, %v1078
  %v1095 = vpack.c.b16 %v1079, %v1079
  %v1096 = vpack.c.b16 %v1080, %v1080
  %v1097 = vpack.c.b16 %v1081, %v1081
  %v1098 = vpack.c.b16 %v1082, %v1082
  %v1099 = vpack.c.b16 %v1083, %v1083
  %v1100 = vpack.c.b16 %v1084, %v1084
  %v1101 = vpack.c.b16 %v1085, %v1085
  %v1102 = vpack.c.b16 %v1086, %v1086
  %v1103 = vpack.c.b16 %v1087, %v1087
  %v1104 = vpack.c.b16 %v1088, %v1088
  %v1105 = vpack.c.b16 %v1089, %v1089
  %v1106 = vpack.c.b16 %v1090, %v1090
  %vm1123 = vcmask 257024
  %1124 = vst.msk [vmem:[%s11] sm:$0xf] %vm1123, %v1091
  %1125 = vst.msk [vmem:[%s11 + $0x4] sm:$0xf] %vm1123, %v1092
  %1126 = vst.msk [vmem:[%s11 + $0x8] sm:$0xf] %vm1123, %v1093
  %1127 = vst.msk [vmem:[%s11 + $0xc] sm:$0xf] %vm1123, %v1094
  %1128 = vst.msk [vmem:[%s11 + $0x10] sm:$0xf] %vm1123, %v1095
  %1129 = vst.msk [vmem:[%s11 + $0x14] sm:$0xf] %vm1123, %v1096
  %1130 = vst.msk [vmem:[%s11 + $0x18] sm:$0xf] %vm1123, %v1097
  %1131 = vst.msk [vmem:[%s11 + $0x1c] sm:$0xf] %vm1123, %v1098
  %1132 = vst.msk [vmem:[%s11 + $0x20] sm:$0xf] %vm1123, %v1099
  %1133 = vst.msk [vmem:[%s11 + $0x24] sm:$0xf] %vm1123, %v1100
  %1134 = vst.msk [vmem:[%s11 + $0x28] sm:$0xf] %vm1123, %v1101
  %1135 = vst.msk [vmem:[%s11 + $0x2c] sm:$0xf] %vm1123, %v1102
  %1136 = vst.msk [vmem:[%s11 + $0x30] sm:$0xf] %vm1123, %v1103
  %1137 = vst.msk [vmem:[%s11 + $0x34] sm:$0xf] %vm1123, %v1104
  %1138 = vst.msk [vmem:[%s11 + $0x38] sm:$0xf] %vm1123, %v1105
  %1139 = vst.msk [vmem:[%s11 + $0x3c] sm:$0xf] %vm1123, %v1106
  // Predicated region
  $region46: #{tpu_custom_call.1} parent=0 // pred_check
    _
  $region47: #{tpu_custom_call.1} parent=0 // pred_check_branch
    %1141 = sbr.rel (0) target = $region49
  $region48: #{tpu_custom_call.1} parent=0 // pred_region
    _
  $region49: #{tpu_custom_call.1} parent=0 // pred_fallthru
    _
  // Predicated region
  $region50: #{tpu_custom_call.1} parent=0 // pred_check
    _
  $region51: #{tpu_custom_call.1} parent=0 // pred_check_branch
    %1143 = sbr.rel (0) target = $region53
  $region52: #{tpu_custom_call.1} parent=0 // pred_region
    _
  $region53: #{tpu_custom_call.1} parent=0 // pred_fallthru
    _

</llo_original>
